<compile_context>
chip_gen: v5e
topology: v5e:2x2
jax: 0.10.0
libtpu: 0.0.40
codegen_flags: <defaults>
</compile_context>

<pallas_src>
import jax
import jax.numpy as jnp
import numpy as np
from jax import lax
from jax.experimental import pallas as pl
from jax.experimental.pallas import tpu as pltpu

VOCAB = 25
HIDDEN = 128


def _make_kernel(B, Bp, T):
    """Kernel closure over static real batch B, padded batch Bp, seq len T."""
    unroll = T <= 32  # full unroll only for short sequences (vreg/code-size)

    def kernel(tok_ref, eproj_ref, whh_ref, wfc_ref, bfc_ref, out_ref, xp_ref):
        # tok_ref  : (B, T) int32 in SMEM
        # eproj_ref: (Vp, H) fused table E' = emb@Wih^T + (b_ih+b_hh), VMEM
        # whh_ref  : (H, H)  VMEM   (W_hh^T)
        # wfc_ref  : (H, Op) VMEM   (W_fc^T, lane-padded)
        # bfc_ref  : (1, Op) VMEM
        # out_ref  : (Bp, Op) VMEM
        # xp_ref   : (T*Bp, H) f32 VMEM scratch (per-step input contributions)
        H = whh_ref.shape[0]

        # Phase 0: zero scratch so padded batch rows get exactly-zero inputs
        # (their hidden state then stays exactly zero through the recurrence).
        xp_ref[...] = jnp.zeros_like(xp_ref)

        # Phase 1: in-kernel embedding+input-projection gather (rows of E').
        def gather_step(t, carry):
            for b in range(B):                      # static tiny loop
                tok = tok_ref[b, t]                 # scalar read from SMEM
                xp_ref[pl.ds(t * Bp + b, 1), :] = eproj_ref[pl.ds(tok, 1), :]
            return carry

        lax.fori_loop(0, T, gather_step, 0, unroll=unroll)

        # Phase 2: serial tanh recurrence; only h @ W_hh^T + tanh per step.
        whh = whh_ref[...]                          # load once, stays resident

        def rnn_step(t, h):
            base = pl.multiple_of(t * Bp, Bp)
            x_t = xp_ref[pl.ds(base, Bp), :]        # (Bp, H)
            return jnp.tanh(
                x_t + jnp.dot(h, whh, preferred_element_type=jnp.float32))

        h = lax.fori_loop(0, T, rnn_step,
                          jnp.zeros((Bp, H), jnp.float32), unroll=unroll)

        # Phase 3: final FC on the last hidden state (lane-dense output).
        out_ref[...] = (jnp.dot(h, wfc_ref[...],
                                preferred_element_type=jnp.float32)
                        + bfc_ref[...]).astype(out_ref.dtype)

    return kernel


def smiles_model_forward(tokens, params):
    """tokens: int32 [B, T]; returns float32 [B, output_size]."""
    emb, w_ih, w_hh, b_ih, b_hh, w_fc, b_fc = (
        params["emb"], params["w_ih"], params["w_hh"],
        params["b_ih"], params["b_hh"], params["w_fc"], params["b_fc"])

    B, T = tokens.shape
    assert T >= 1, "sequence length must be >= 1"
    V, H = emb.shape
    O = w_fc.shape[0]

    Bp = max(8, ((B + 7) // 8) * 8)          # pad batch to f32 sublane group
    Op = max(128, ((O + 127) // 128) * 128)  # lane-dense FC output
    Vp = ((V + 7) // 8) * 8                  # pad vocab rows (25 -> 32)

    # Fused embedding + input projection table (param-only, tiny).
    eproj = emb @ w_ih.T + (b_ih + b_hh)                 # (V, H)
    eproj = jnp.pad(eproj, ((0, Vp - V), (0, 0)))        # (Vp, H)

    whh_t = w_hh.T                                       # (H, H)
    wfc_p = jnp.pad(w_fc.T, ((0, 0), (0, Op - O)))       # (H, Op)
    bfc_p = jnp.pad(b_fc, (0, Op - O)).reshape(1, Op)    # (1, Op)

    tokens = tokens.astype(jnp.int32)

    smem = pl.BlockSpec(memory_space=pltpu.MemorySpace.SMEM)
    vmem = pl.BlockSpec(memory_space=pltpu.MemorySpace.VMEM)

    # TODO(synk): for deployed batches >= 16 on v7x, add a batch grid axis with
    # dimension_semantics=("parallel",) so both TensorCores run the recurrence.
    out_padded = pl.pallas_call(
        _make_kernel(B, Bp, T),
        out_shape=jax.ShapeDtypeStruct((Bp, Op), jnp.float32),
        in_specs=[smem, vmem, vmem, vmem, vmem],
        out_specs=vmem,
        scratch_shapes=[pltpu.VMEM((T * Bp, H), jnp.float32)],
        compiler_params=pltpu.CompilerParams(
            vmem_limit_bytes=32 * 1024 * 1024),
    )(tokens, eproj, whh_t, wfc_p, bfc_p)

    return out_padded[:B, :O]


def make_params(key, output_size):
    ks = jax.random.split(key, 7)
    scale = 1.0 / np.sqrt(HIDDEN)
    return {
        "emb":  jax.random.normal(ks[0], (VOCAB, HIDDEN), jnp.float32) * 0.1,
        "w_ih": jax.random.uniform(ks[1], (HIDDEN, HIDDEN), jnp.float32,
                                   -scale, scale),
        "w_hh": jax.random.uniform(ks[2], (HIDDEN, HIDDEN), jnp.float32,
                                   -scale, scale),
        "b_ih": jax.random.uniform(ks[3], (HIDDEN,), jnp.float32, -scale, scale),
        "b_hh": jax.random.uniform(ks[4], (HIDDEN,), jnp.float32, -scale, scale),
        "w_fc": jax.random.uniform(ks[5], (output_size, HIDDEN), jnp.float32,
                                   -scale, scale),
        "b_fc": jax.random.uniform(ks[6], (output_size,), jnp.float32,
                                   -scale, scale),
    }


def reference_forward(tokens, params):
    """Pure-JAX reference matching the PyTorch forward semantics."""
    x = params["emb"][tokens]                            # (B, T, H)
    B, T, H = x.shape
    h = jnp.zeros((B, H), jnp.float32)
    for t in range(T):
        h = jnp.tanh(x[:, t, :] @ params["w_ih"].T + params["b_ih"]
                     + h @ params["w_hh"].T + params["b_hh"])
    return h @ params["w_fc"].T + params["b_fc"]


if __name__ == "__main__":
    B, T = 2, 8
    OUTPUT_SIZE = 10

    key = jax.random.PRNGKey(0)
    k_tok, k_par = jax.random.split(key)
    tokens = jax.random.randint(k_tok, (B, T), 0, VOCAB, dtype=jnp.int32)
    params = make_params(k_par, OUTPUT_SIZE)

    fwd = jax.jit(smiles_model_forward)
    out = fwd(tokens, params)
    out = jax.block_until_ready(out)

    ref = reference_forward(tokens, params)
    np.testing.assert_allclose(np.asarray(out), np.asarray(ref),
                               rtol=1e-4, atol=1e-4)
    print("KERNEL_OK")
</pallas_src>

<mosaic_0001>
module attributes {stable_mosaic.version = 11 : i64} {
  func.func @kernel(%arg0: memref<2x8xi32, #tpu.memory_space<smem>>, %arg1: memref<32x128xf32, #tpu.memory_space<vmem>>, %arg2: memref<128x128xf32, #tpu.memory_space<vmem>>, %arg3: memref<128x128xf32, #tpu.memory_space<vmem>>, %arg4: memref<1x128xf32, #tpu.memory_space<vmem>>, %arg5: memref<8x128xf32, #tpu.memory_space<vmem>>, %arg6: memref<64x128xf32, #tpu.memory_space<vmem>>) attributes {dimension_semantics = [], scalar_prefetch = 0 : i64, scratch_operands = 1 : i64, tpu.core_type = #tpu.core_type<tc>} {
    %cst = arith.constant 0.000000e+00 : f32
    %0 = vector.broadcast %cst : f32 to vector<64x128xf32>
    %c0 = arith.constant 0 : index
    %c0_0 = arith.constant 0 : index
    %1 = vector.load %arg6[%c0, %c0_0] : memref<64x128xf32, #tpu.memory_space<vmem>>, vector<64x128xf32>
    tpu.vector_store %arg6[%c0, %c0_0], %0 {strides = array<i32>} : memref<64x128xf32, #tpu.memory_space<vmem>>, vector<64x128xf32>,
    %c0_i32 = arith.constant 0 : i32
    %c0_1 = arith.constant 0 : index
    %2 = arith.index_cast %c0_i32 : i32 to index
    %3 = memref.load %arg0[%c0_1, %2] : memref<2x8xi32, #tpu.memory_space<smem>>
    %4 = arith.index_cast %3 : i32 to index
    %c0_2 = arith.constant 0 : index
    %5 = vector.load %arg1[%4, %c0_2] : memref<32x128xf32, #tpu.memory_space<vmem>>, vector<1x128xf32>
    %c8_i32 = arith.constant 8 : i32
    %6 = arith.muli %c0_i32, %c8_i32 : i32
    %c0_i32_3 = arith.constant 0 : i32
    %7 = arith.addi %6, %c0_i32_3 : i32
    %8 = arith.index_cast %7 : i32 to index
    %c0_4 = arith.constant 0 : index
    %9 = vector.load %arg6[%8, %c0_4] : memref<64x128xf32, #tpu.memory_space<vmem>>, vector<1x128xf32>
    tpu.vector_store %arg6[%8, %c0_4], %5 {strides = array<i32>} : memref<64x128xf32, #tpu.memory_space<vmem>>, vector<1x128xf32>,
    %c1 = arith.constant 1 : index
    %10 = arith.index_cast %c0_i32 : i32 to index
    %11 = memref.load %arg0[%c1, %10] : memref<2x8xi32, #tpu.memory_space<smem>>
    %12 = arith.index_cast %11 : i32 to index
    %c0_5 = arith.constant 0 : index
    %13 = vector.load %arg1[%12, %c0_5] : memref<32x128xf32, #tpu.memory_space<vmem>>, vector<1x128xf32>
    %c8_i32_6 = arith.constant 8 : i32
    %14 = arith.muli %c0_i32, %c8_i32_6 : i32
    %c1_i32 = arith.constant 1 : i32
    %15 = arith.addi %14, %c1_i32 : i32
    %16 = arith.index_cast %15 : i32 to index
    %c0_7 = arith.constant 0 : index
    %17 = vector.load %arg6[%16, %c0_7] : memref<64x128xf32, #tpu.memory_space<vmem>>, vector<1x128xf32>
    tpu.vector_store %arg6[%16, %c0_7], %13 {strides = array<i32>} : memref<64x128xf32, #tpu.memory_space<vmem>>, vector<1x128xf32>,
    %c1_i32_8 = arith.constant 1 : i32
    %c0_9 = arith.constant 0 : index
    %18 = arith.index_cast %c1_i32_8 : i32 to index
    %19 = memref.load %arg0[%c0_9, %18] : memref<2x8xi32, #tpu.memory_space<smem>>
    %20 = arith.index_cast %19 : i32 to index
    %c0_10 = arith.constant 0 : index
    %21 = vector.load %arg1[%20, %c0_10] : memref<32x128xf32, #tpu.memory_space<vmem>>, vector<1x128xf32>
    %c8_i32_11 = arith.constant 8 : i32
    %22 = arith.muli %c1_i32_8, %c8_i32_11 : i32
    %c0_i32_12 = arith.constant 0 : i32
    %23 = arith.addi %22, %c0_i32_12 : i32
    %24 = arith.index_cast %23 : i32 to index
    %c0_13 = arith.constant 0 : index
    %25 = vector.load %arg6[%24, %c0_13] : memref<64x128xf32, #tpu.memory_space<vmem>>, vector<1x128xf32>
    tpu.vector_store %arg6[%24, %c0_13], %21 {strides = array<i32>} : memref<64x128xf32, #tpu.memory_space<vmem>>, vector<1x128xf32>,
    %c1_14 = arith.constant 1 : index
    %26 = arith.index_cast %c1_i32_8 : i32 to index
    %27 = memref.load %arg0[%c1_14, %26] : memref<2x8xi32, #tpu.memory_space<smem>>
    %28 = arith.index_cast %27 : i32 to index
    %c0_15 = arith.constant 0 : index
    %29 = vector.load %arg1[%28, %c0_15] : memref<32x128xf32, #tpu.memory_space<vmem>>, vector<1x128xf32>
    %c8_i32_16 = arith.constant 8 : i32
    %30 = arith.muli %c1_i32_8, %c8_i32_16 : i32
    %c1_i32_17 = arith.constant 1 : i32
    %31 = arith.addi %30, %c1_i32_17 : i32
    %32 = arith.index_cast %31 : i32 to index
    %c0_18 = arith.constant 0 : index
    %33 = vector.load %arg6[%32, %c0_18] : memref<64x128xf32, #tpu.memory_space<vmem>>, vector<1x128xf32>
    tpu.vector_store %arg6[%32, %c0_18], %29 {strides = array<i32>} : memref<64x128xf32, #tpu.memory_space<vmem>>, vector<1x128xf32>,
    %c2_i32 = arith.constant 2 : i32
    %c0_19 = arith.constant 0 : index
    %34 = arith.index_cast %c2_i32 : i32 to index
    %35 = memref.load %arg0[%c0_19, %34] : memref<2x8xi32, #tpu.memory_space<smem>>
    %36 = arith.index_cast %35 : i32 to index
    %c0_20 = arith.constant 0 : index
    %37 = vector.load %arg1[%36, %c0_20] : memref<32x128xf32, #tpu.memory_space<vmem>>, vector<1x128xf32>
    %c8_i32_21 = arith.constant 8 : i32
    %38 = arith.muli %c2_i32, %c8_i32_21 : i32
    %c0_i32_22 = arith.constant 0 : i32
    %39 = arith.addi %38, %c0_i32_22 : i32
    %40 = arith.index_cast %39 : i32 to index
    %c0_23 = arith.constant 0 : index
    %41 = vector.load %arg6[%40, %c0_23] : memref<64x128xf32, #tpu.memory_space<vmem>>, vector<1x128xf32>
    tpu.vector_store %arg6[%40, %c0_23], %37 {strides = array<i32>} : memref<64x128xf32, #tpu.memory_space<vmem>>, vector<1x128xf32>,
    %c1_24 = arith.constant 1 : index
    %42 = arith.index_cast %c2_i32 : i32 to index
    %43 = memref.load %arg0[%c1_24, %42] : memref<2x8xi32, #tpu.memory_space<smem>>
    %44 = arith.index_cast %43 : i32 to index
    %c0_25 = arith.constant 0 : index
    %45 = vector.load %arg1[%44, %c0_25] : memref<32x128xf32, #tpu.memory_space<vmem>>, vector<1x128xf32>
    %c8_i32_26 = arith.constant 8 : i32
    %46 = arith.muli %c2_i32, %c8_i32_26 : i32
    %c1_i32_27 = arith.constant 1 : i32
    %47 = arith.addi %46, %c1_i32_27 : i32
    %48 = arith.index_cast %47 : i32 to index
    %c0_28 = arith.constant 0 : index
    %49 = vector.load %arg6[%48, %c0_28] : memref<64x128xf32, #tpu.memory_space<vmem>>, vector<1x128xf32>
    tpu.vector_store %arg6[%48, %c0_28], %45 {strides = array<i32>} : memref<64x128xf32, #tpu.memory_space<vmem>>, vector<1x128xf32>,
    %c3_i32 = arith.constant 3 : i32
    %c0_29 = arith.constant 0 : index
    %50 = arith.index_cast %c3_i32 : i32 to index
    %51 = memref.load %arg0[%c0_29, %50] : memref<2x8xi32, #tpu.memory_space<smem>>
    %52 = arith.index_cast %51 : i32 to index
    %c0_30 = arith.constant 0 : index
    %53 = vector.load %arg1[%52, %c0_30] : memref<32x128xf32, #tpu.memory_space<vmem>>, vector<1x128xf32>
    %c8_i32_31 = arith.constant 8 : i32
    %54 = arith.muli %c3_i32, %c8_i32_31 : i32
    %c0_i32_32 = arith.constant 0 : i32
    %55 = arith.addi %54, %c0_i32_32 : i32
    %56 = arith.index_cast %55 : i32 to index
    %c0_33 = arith.constant 0 : index
    %57 = vector.load %arg6[%56, %c0_33] : memref<64x128xf32, #tpu.memory_space<vmem>>, vector<1x128xf32>
    tpu.vector_store %arg6[%56, %c0_33], %53 {strides = array<i32>} : memref<64x128xf32, #tpu.memory_space<vmem>>, vector<1x128xf32>,
    %c1_34 = arith.constant 1 : index
    %58 = arith.index_cast %c3_i32 : i32 to index
    %59 = memref.load %arg0[%c1_34, %58] : memref<2x8xi32, #tpu.memory_space<smem>>
    %60 = arith.index_cast %59 : i32 to index
    %c0_35 = arith.constant 0 : index
    %61 = vector.load %arg1[%60, %c0_35] : memref<32x128xf32, #tpu.memory_space<vmem>>, vector<1x128xf32>
    %c8_i32_36 = arith.constant 8 : i32
    %62 = arith.muli %c3_i32, %c8_i32_36 : i32
    %c1_i32_37 = arith.constant 1 : i32
    %63 = arith.addi %62, %c1_i32_37 : i32
    %64 = arith.index_cast %63 : i32 to index
    %c0_38 = arith.constant 0 : index
    %65 = vector.load %arg6[%64, %c0_38] : memref<64x128xf32, #tpu.memory_space<vmem>>, vector<1x128xf32>
    tpu.vector_store %arg6[%64, %c0_38], %61 {strides = array<i32>} : memref<64x128xf32, #tpu.memory_space<vmem>>, vector<1x128xf32>,
    %c4_i32 = arith.constant 4 : i32
    %c0_39 = arith.constant 0 : index
    %66 = arith.index_cast %c4_i32 : i32 to index
    %67 = memref.load %arg0[%c0_39, %66] : memref<2x8xi32, #tpu.memory_space<smem>>
    %68 = arith.index_cast %67 : i32 to index
    %c0_40 = arith.constant 0 : index
    %69 = vector.load %arg1[%68, %c0_40] : memref<32x128xf32, #tpu.memory_space<vmem>>, vector<1x128xf32>
    %c8_i32_41 = arith.constant 8 : i32
    %70 = arith.muli %c4_i32, %c8_i32_41 : i32
    %c0_i32_42 = arith.constant 0 : i32
    %71 = arith.addi %70, %c0_i32_42 : i32
    %72 = arith.index_cast %71 : i32 to index
    %c0_43 = arith.constant 0 : index
    %73 = vector.load %arg6[%72, %c0_43] : memref<64x128xf32, #tpu.memory_space<vmem>>, vector<1x128xf32>
    tpu.vector_store %arg6[%72, %c0_43], %69 {strides = array<i32>} : memref<64x128xf32, #tpu.memory_space<vmem>>, vector<1x128xf32>,
    %c1_44 = arith.constant 1 : index
    %74 = arith.index_cast %c4_i32 : i32 to index
    %75 = memref.load %arg0[%c1_44, %74] : memref<2x8xi32, #tpu.memory_space<smem>>
    %76 = arith.index_cast %75 : i32 to index
    %c0_45 = arith.constant 0 : index
    %77 = vector.load %arg1[%76, %c0_45] : memref<32x128xf32, #tpu.memory_space<vmem>>, vector<1x128xf32>
    %c8_i32_46 = arith.constant 8 : i32
    %78 = arith.muli %c4_i32, %c8_i32_46 : i32
    %c1_i32_47 = arith.constant 1 : i32
    %79 = arith.addi %78, %c1_i32_47 : i32
    %80 = arith.index_cast %79 : i32 to index
    %c0_48 = arith.constant 0 : index
    %81 = vector.load %arg6[%80, %c0_48] : memref<64x128xf32, #tpu.memory_space<vmem>>, vector<1x128xf32>
    tpu.vector_store %arg6[%80, %c0_48], %77 {strides = array<i32>} : memref<64x128xf32, #tpu.memory_space<vmem>>, vector<1x128xf32>,
    %c5_i32 = arith.constant 5 : i32
    %c0_49 = arith.constant 0 : index
    %82 = arith.index_cast %c5_i32 : i32 to index
    %83 = memref.load %arg0[%c0_49, %82] : memref<2x8xi32, #tpu.memory_space<smem>>
    %84 = arith.index_cast %83 : i32 to index
    %c0_50 = arith.constant 0 : index
    %85 = vector.load %arg1[%84, %c0_50] : memref<32x128xf32, #tpu.memory_space<vmem>>, vector<1x128xf32>
    %c8_i32_51 = arith.constant 8 : i32
    %86 = arith.muli %c5_i32, %c8_i32_51 : i32
    %c0_i32_52 = arith.constant 0 : i32
    %87 = arith.addi %86, %c0_i32_52 : i32
    %88 = arith.index_cast %87 : i32 to index
    %c0_53 = arith.constant 0 : index
    %89 = vector.load %arg6[%88, %c0_53] : memref<64x128xf32, #tpu.memory_space<vmem>>, vector<1x128xf32>
    tpu.vector_store %arg6[%88, %c0_53], %85 {strides = array<i32>} : memref<64x128xf32, #tpu.memory_space<vmem>>, vector<1x128xf32>,
    %c1_54 = arith.constant 1 : index
    %90 = arith.index_cast %c5_i32 : i32 to index
    %91 = memref.load %arg0[%c1_54, %90] : memref<2x8xi32, #tpu.memory_space<smem>>
    %92 = arith.index_cast %91 : i32 to index
    %c0_55 = arith.constant 0 : index
    %93 = vector.load %arg1[%92, %c0_55] : memref<32x128xf32, #tpu.memory_space<vmem>>, vector<1x128xf32>
    %c8_i32_56 = arith.constant 8 : i32
    %94 = arith.muli %c5_i32, %c8_i32_56 : i32
    %c1_i32_57 = arith.constant 1 : i32
    %95 = arith.addi %94, %c1_i32_57 : i32
    %96 = arith.index_cast %95 : i32 to index
    %c0_58 = arith.constant 0 : index
    %97 = vector.load %arg6[%96, %c0_58] : memref<64x128xf32, #tpu.memory_space<vmem>>, vector<1x128xf32>
    tpu.vector_store %arg6[%96, %c0_58], %93 {strides = array<i32>} : memref<64x128xf32, #tpu.memory_space<vmem>>, vector<1x128xf32>,
    %c6_i32 = arith.constant 6 : i32
    %c0_59 = arith.constant 0 : index
    %98 = arith.index_cast %c6_i32 : i32 to index
    %99 = memref.load %arg0[%c0_59, %98] : memref<2x8xi32, #tpu.memory_space<smem>>
    %100 = arith.index_cast %99 : i32 to index
    %c0_60 = arith.constant 0 : index
    %101 = vector.load %arg1[%100, %c0_60] : memref<32x128xf32, #tpu.memory_space<vmem>>, vector<1x128xf32>
    %c8_i32_61 = arith.constant 8 : i32
    %102 = arith.muli %c6_i32, %c8_i32_61 : i32
    %c0_i32_62 = arith.constant 0 : i32
    %103 = arith.addi %102, %c0_i32_62 : i32
    %104 = arith.index_cast %103 : i32 to index
    %c0_63 = arith.constant 0 : index
    %105 = vector.load %arg6[%104, %c0_63] : memref<64x128xf32, #tpu.memory_space<vmem>>, vector<1x128xf32>
    tpu.vector_store %arg6[%104, %c0_63], %101 {strides = array<i32>} : memref<64x128xf32, #tpu.memory_space<vmem>>, vector<1x128xf32>,
    %c1_64 = arith.constant 1 : index
    %106 = arith.index_cast %c6_i32 : i32 to index
    %107 = memref.load %arg0[%c1_64, %106] : memref<2x8xi32, #tpu.memory_space<smem>>
    %108 = arith.index_cast %107 : i32 to index
    %c0_65 = arith.constant 0 : index
    %109 = vector.load %arg1[%108, %c0_65] : memref<32x128xf32, #tpu.memory_space<vmem>>, vector<1x128xf32>
    %c8_i32_66 = arith.constant 8 : i32
    %110 = arith.muli %c6_i32, %c8_i32_66 : i32
    %c1_i32_67 = arith.constant 1 : i32
    %111 = arith.addi %110, %c1_i32_67 : i32
    %112 = arith.index_cast %111 : i32 to index
    %c0_68 = arith.constant 0 : index
    %113 = vector.load %arg6[%112, %c0_68] : memref<64x128xf32, #tpu.memory_space<vmem>>, vector<1x128xf32>
    tpu.vector_store %arg6[%112, %c0_68], %109 {strides = array<i32>} : memref<64x128xf32, #tpu.memory_space<vmem>>, vector<1x128xf32>,
    %c7_i32 = arith.constant 7 : i32
    %c0_69 = arith.constant 0 : index
    %114 = arith.index_cast %c7_i32 : i32 to index
    %115 = memref.load %arg0[%c0_69, %114] : memref<2x8xi32, #tpu.memory_space<smem>>
    %116 = arith.index_cast %115 : i32 to index
    %c0_70 = arith.constant 0 : index
    %117 = vector.load %arg1[%116, %c0_70] : memref<32x128xf32, #tpu.memory_space<vmem>>, vector<1x128xf32>
    %c8_i32_71 = arith.constant 8 : i32
    %118 = arith.muli %c7_i32, %c8_i32_71 : i32
    %c0_i32_72 = arith.constant 0 : i32
    %119 = arith.addi %118, %c0_i32_72 : i32
    %120 = arith.index_cast %119 : i32 to index
    %c0_73 = arith.constant 0 : index
    %121 = vector.load %arg6[%120, %c0_73] : memref<64x128xf32, #tpu.memory_space<vmem>>, vector<1x128xf32>
    tpu.vector_store %arg6[%120, %c0_73], %117 {strides = array<i32>} : memref<64x128xf32, #tpu.memory_space<vmem>>, vector<1x128xf32>,
    %c1_74 = arith.constant 1 : index
    %122 = arith.index_cast %c7_i32 : i32 to index
    %123 = memref.load %arg0[%c1_74, %122] : memref<2x8xi32, #tpu.memory_space<smem>>
    %124 = arith.index_cast %123 : i32 to index
    %c0_75 = arith.constant 0 : index
    %125 = vector.load %arg1[%124, %c0_75] : memref<32x128xf32, #tpu.memory_space<vmem>>, vector<1x128xf32>
    %c8_i32_76 = arith.constant 8 : i32
    %126 = arith.muli %c7_i32, %c8_i32_76 : i32
    %c1_i32_77 = arith.constant 1 : i32
    %127 = arith.addi %126, %c1_i32_77 : i32
    %128 = arith.index_cast %127 : i32 to index
    %c0_78 = arith.constant 0 : index
    %129 = vector.load %arg6[%128, %c0_78] : memref<64x128xf32, #tpu.memory_space<vmem>>, vector<1x128xf32>
    tpu.vector_store %arg6[%128, %c0_78], %125 {strides = array<i32>} : memref<64x128xf32, #tpu.memory_space<vmem>>, vector<1x128xf32>,
    %c8_i32_79 = arith.constant 8 : i32
    %c0_80 = arith.constant 0 : index
    %c0_81 = arith.constant 0 : index
    %130 = vector.load %arg2[%c0_80, %c0_81] : memref<128x128xf32, #tpu.memory_space<vmem>>, vector<128x128xf32>
    %cst_82 = arith.constant 0.000000e+00 : f32
    %131 = vector.broadcast %cst_82 : f32 to vector<8x128xf32>
    %c0_i32_83 = arith.constant 0 : i32
    %c8_i32_84 = arith.constant 8 : i32
    %132 = arith.muli %c0_i32_83, %c8_i32_84 : i32
    %133 = tpu.assume_multiple %132, 8 : i32
    %134 = arith.index_cast %133 : i32 to index
    %c0_85 = arith.constant 0 : index
    %135 = vector.load %arg6[%134, %c0_85] : memref<64x128xf32, #tpu.memory_space<vmem>>, vector<8x128xf32>
    %cst_86 = arith.constant dense<0.000000e+00> : vector<8x128xf32>
    %136 = tpu.matmul %131, %130, %cst_86 {dimension_numbers = #tpu.dot_dimension_numbers<[1], [0], [0], [1], [0, 0, 1, 1], [], []>} : vector<8x128xf32>, vector<128x128xf32>, vector<8x128xf32> -> vector<8x128xf32>
    %137 = arith.addf %135, %136 : vector<8x128xf32>
    %138 = math.tanh %137 : vector<8x128xf32>
    %c1_i32_87 = arith.constant 1 : i32
    %c8_i32_88 = arith.constant 8 : i32
    %139 = arith.muli %c1_i32_87, %c8_i32_88 : i32
    %140 = tpu.assume_multiple %139, 8 : i32
    %141 = arith.index_cast %140 : i32 to index
    %c0_89 = arith.constant 0 : index
    %142 = vector.load %arg6[%141, %c0_89] : memref<64x128xf32, #tpu.memory_space<vmem>>, vector<8x128xf32>
    %cst_90 = arith.constant dense<0.000000e+00> : vector<8x128xf32>
    %143 = tpu.matmul %138, %130, %cst_90 {dimension_numbers = #tpu.dot_dimension_numbers<[1], [0], [0], [1], [0, 0, 1, 1], [], []>} : vector<8x128xf32>, vector<128x128xf32>, vector<8x128xf32> -> vector<8x128xf32>
    %144 = arith.addf %142, %143 : vector<8x128xf32>
    %145 = math.tanh %144 : vector<8x128xf32>
    %c2_i32_91 = arith.constant 2 : i32
    %c8_i32_92 = arith.constant 8 : i32
    %146 = arith.muli %c2_i32_91, %c8_i32_92 : i32
    %147 = tpu.assume_multiple %146, 8 : i32
    %148 = arith.index_cast %147 : i32 to index
    %c0_93 = arith.constant 0 : index
    %149 = vector.load %arg6[%148, %c0_93] : memref<64x128xf32, #tpu.memory_space<vmem>>, vector<8x128xf32>
    %cst_94 = arith.constant dense<0.000000e+00> : vector<8x128xf32>
    %150 = tpu.matmul %145, %130, %cst_94 {dimension_numbers = #tpu.dot_dimension_numbers<[1], [0], [0], [1], [0, 0, 1, 1], [], []>} : vector<8x128xf32>, vector<128x128xf32>, vector<8x128xf32> -> vector<8x128xf32>
    %151 = arith.addf %149, %150 : vector<8x128xf32>
    %152 = math.tanh %151 : vector<8x128xf32>
    %c3_i32_95 = arith.constant 3 : i32
    %c8_i32_96 = arith.constant 8 : i32
    %153 = arith.muli %c3_i32_95, %c8_i32_96 : i32
    %154 = tpu.assume_multiple %153, 8 : i32
    %155 = arith.index_cast %154 : i32 to index
    %c0_97 = arith.constant 0 : index
    %156 = vector.load %arg6[%155, %c0_97] : memref<64x128xf32, #tpu.memory_space<vmem>>, vector<8x128xf32>
    %cst_98 = arith.constant dense<0.000000e+00> : vector<8x128xf32>
    %157 = tpu.matmul %152, %130, %cst_98 {dimension_numbers = #tpu.dot_dimension_numbers<[1], [0], [0], [1], [0, 0, 1, 1], [], []>} : vector<8x128xf32>, vector<128x128xf32>, vector<8x128xf32> -> vector<8x128xf32>
    %158 = arith.addf %156, %157 : vector<8x128xf32>
    %159 = math.tanh %158 : vector<8x128xf32>
    %c4_i32_99 = arith.constant 4 : i32
    %c8_i32_100 = arith.constant 8 : i32
    %160 = arith.muli %c4_i32_99, %c8_i32_100 : i32
    %161 = tpu.assume_multiple %160, 8 : i32
    %162 = arith.index_cast %161 : i32 to index
    %c0_101 = arith.constant 0 : index
    %163 = vector.load %arg6[%162, %c0_101] : memref<64x128xf32, #tpu.memory_space<vmem>>, vector<8x128xf32>
    %cst_102 = arith.constant dense<0.000000e+00> : vector<8x128xf32>
    %164 = tpu.matmul %159, %130, %cst_102 {dimension_numbers = #tpu.dot_dimension_numbers<[1], [0], [0], [1], [0, 0, 1, 1], [], []>} : vector<8x128xf32>, vector<128x128xf32>, vector<8x128xf32> -> vector<8x128xf32>
    %165 = arith.addf %163, %164 : vector<8x128xf32>
    %166 = math.tanh %165 : vector<8x128xf32>
    %c5_i32_103 = arith.constant 5 : i32
    %c8_i32_104 = arith.constant 8 : i32
    %167 = arith.muli %c5_i32_103, %c8_i32_104 : i32
    %168 = tpu.assume_multiple %167, 8 : i32
    %169 = arith.index_cast %168 : i32 to index
    %c0_105 = arith.constant 0 : index
    %170 = vector.load %arg6[%169, %c0_105] : memref<64x128xf32, #tpu.memory_space<vmem>>, vector<8x128xf32>
    %cst_106 = arith.constant dense<0.000000e+00> : vector<8x128xf32>
    %171 = tpu.matmul %166, %130, %cst_106 {dimension_numbers = #tpu.dot_dimension_numbers<[1], [0], [0], [1], [0, 0, 1, 1], [], []>} : vector<8x128xf32>, vector<128x128xf32>, vector<8x128xf32> -> vector<8x128xf32>
    %172 = arith.addf %170, %171 : vector<8x128xf32>
    %173 = math.tanh %172 : vector<8x128xf32>
    %c6_i32_107 = arith.constant 6 : i32
    %c8_i32_108 = arith.constant 8 : i32
    %174 = arith.muli %c6_i32_107, %c8_i32_108 : i32
    %175 = tpu.assume_multiple %174, 8 : i32
    %176 = arith.index_cast %175 : i32 to index
    %c0_109 = arith.constant 0 : index
    %177 = vector.load %arg6[%176, %c0_109] : memref<64x128xf32, #tpu.memory_space<vmem>>, vector<8x128xf32>
    %cst_110 = arith.constant dense<0.000000e+00> : vector<8x128xf32>
    %178 = tpu.matmul %173, %130, %cst_110 {dimension_numbers = #tpu.dot_dimension_numbers<[1], [0], [0], [1], [0, 0, 1, 1], [], []>} : vector<8x128xf32>, vector<128x128xf32>, vector<8x128xf32> -> vector<8x128xf32>
    %179 = arith.addf %177, %178 : vector<8x128xf32>
    %180 = math.tanh %179 : vector<8x128xf32>
    %c7_i32_111 = arith.constant 7 : i32
    %c8_i32_112 = arith.constant 8 : i32
    %181 = arith.muli %c7_i32_111, %c8_i32_112 : i32
    %182 = tpu.assume_multiple %181, 8 : i32
    %183 = arith.index_cast %182 : i32 to index
    %c0_113 = arith.constant 0 : index
    %184 = vector.load %arg6[%183, %c0_113] : memref<64x128xf32, #tpu.memory_space<vmem>>, vector<8x128xf32>
    %cst_114 = arith.constant dense<0.000000e+00> : vector<8x128xf32>
    %185 = tpu.matmul %180, %130, %cst_114 {dimension_numbers = #tpu.dot_dimension_numbers<[1], [0], [0], [1], [0, 0, 1, 1], [], []>} : vector<8x128xf32>, vector<128x128xf32>, vector<8x128xf32> -> vector<8x128xf32>
    %186 = arith.addf %184, %185 : vector<8x128xf32>
    %187 = math.tanh %186 : vector<8x128xf32>
    %c8_i32_115 = arith.constant 8 : i32
    %c0_116 = arith.constant 0 : index
    %c0_117 = arith.constant 0 : index
    %188 = vector.load %arg3[%c0_116, %c0_117] : memref<128x128xf32, #tpu.memory_space<vmem>>, vector<128x128xf32>
    %cst_118 = arith.constant dense<0.000000e+00> : vector<8x128xf32>
    %189 = tpu.matmul %187, %188, %cst_118 {dimension_numbers = #tpu.dot_dimension_numbers<[1], [0], [0], [1], [0, 0, 1, 1], [], []>} : vector<8x128xf32>, vector<128x128xf32>, vector<8x128xf32> -> vector<8x128xf32>
    %c0_119 = arith.constant 0 : index
    %c0_120 = arith.constant 0 : index
    %190 = vector.load %arg4[%c0_119, %c0_120] : memref<1x128xf32, #tpu.memory_space<vmem>>, vector<1x128xf32>
    %191 = vector.broadcast %190 : vector<1x128xf32> to vector<8x128xf32>
    %192 = arith.addf %189, %191 : vector<8x128xf32>
    %c0_121 = arith.constant 0 : index
    %c0_122 = arith.constant 0 : index
    %193 = vector.load %arg5[%c0_121, %c0_122] : memref<8x128xf32, #tpu.memory_space<vmem>>, vector<8x128xf32>
    tpu.vector_store %arg5[%c0_121, %c0_122], %192 {strides = array<i32>} : memref<8x128xf32, #tpu.memory_space<vmem>>, vector<8x128xf32>,
    return
  }
}

</mosaic_0001>

<llo_original>
// kernel: smiles_model_forward.1
$region0: #{smiles_model_forward.1}
  #allocation0 [shape = 'u32[]', space=smem, size = 0x4, offset = 0x4, fixed_abs, tag = 'smem constant byte address 0x4 - core index']
  #allocation1 [shape = 'u32[72,128]{1,0:T(1,128)}', space=vmem, size = 0x9000, scoped, tag = 'internal scratch']
  #allocation2 [shape = 'f32[64,128]{1,0:T(8,128)}', space=vmem, size = 0x8000, scoped, tag = 'scratch operand']
  %s0 = inlined_call_operand.vmem [shape: s32[2,8], index: 0, kind: input, shape index: {}]
  %s1 = inlined_call_operand.vmem [shape: f32[32,128], index: 1, kind: input, shape index: {}]
  %s2 = inlined_call_operand.vmem [shape: f32[128,128], index: 2, kind: input, shape index: {}]
  %s3 = inlined_call_operand.vmem [shape: f32[128,128], index: 3, kind: input, shape index: {}]
  %s4 = inlined_call_operand.vmem [shape: f32[1,128], index: 4, kind: input, shape index: {}]
  %s5 = inlined_call_operand.vmem [shape: f32[8,128], index: 5, kind: output, shape index: {}]
  %s6 = sld [smem:[#allocation0]]
  $region34: #{smiles_model_forward.1} parent=0
    _
  %s8 = ssub.s32 1, %s6
  %s9 = scalar_select 0, %s8, %s6
  $region1: #{smiles_model_forward.1} parent=0
    #allocation3 [shape = 'u8[1024]{0}', space=smem, size = 0x400, scoped, tag = 'input window, operand 0, single buffered']
    #allocation4 [shape = 's32[1]{0}', space=sflag, size = 0x4, scoped, tag = 'scoped memory for smiles_model_forward.1']
    %10 = vsyncpa [#allocation4], 0
    // Predicated region
    $region2: #{smiles_model_forward.1} parent=1 // pred_check
      _
    $region3: #{smiles_model_forward.1} parent=1 // pred_check_branch
      %12 = sbr.rel (0) target = $region5
    $region4: #{smiles_model_forward.1} parent=1 // pred_region
      %14 = vsyncadd [#allocation4], 0
      %s16 = sshll.u32 %s0, 4
      %s17 = int_to_ptr.vmem [resolvable:$true] %s16
      %19 = dma.vmem_to_smem %s17, 32, [#allocation3], [#allocation4]
    $region5: #{smiles_model_forward.1} parent=1 // pred_fallthru
      _
    // Predicated region
    $region6: #{smiles_model_forward.1} parent=1 // pred_check
      _
    $region7: #{smiles_model_forward.1} parent=1 // pred_check_branch
      %21 = sbr.rel (0) target = $region9
    $region8: #{smiles_model_forward.1} parent=1 // pred_region
      _
    $region9: #{smiles_model_forward.1} parent=1 // pred_fallthru
      _
    // Predicated region
    $region10: #{smiles_model_forward.1} parent=1 // pred_check
      _
    $region11: #{smiles_model_forward.1} parent=1 // pred_check_branch
      %23 = sbr.rel (0) target = $region13
    $region12: #{smiles_model_forward.1} parent=1 // pred_region
      _
    $region13: #{smiles_model_forward.1} parent=1 // pred_fallthru
      _
    // Predicated region
    $region14: #{smiles_model_forward.1} parent=1 // pred_check
      _
    $region15: #{smiles_model_forward.1} parent=1 // pred_check_branch
      %25 = sbr.rel (0) target = $region17
    $region16: #{smiles_model_forward.1} parent=1 // pred_region
      _
    $region17: #{smiles_model_forward.1} parent=1 // pred_fallthru
      _
    // Predicated region
    $region18: #{smiles_model_forward.1} parent=1 // pred_check
      _
    $region19: #{smiles_model_forward.1} parent=1 // pred_check_branch
      %27 = sbr.rel (0) target = $region21
    $region20: #{smiles_model_forward.1} parent=1 // pred_region
      _
    $region21: #{smiles_model_forward.1} parent=1 // pred_fallthru
      _
    // Predicated region
    $region22: #{smiles_model_forward.1} parent=1 // pred_check
      _
    $region23: #{smiles_model_forward.1} parent=1 // pred_check_branch
      %29 = sbr.rel (0) target = $region25
    $region24: #{smiles_model_forward.1} parent=1 // pred_region
      %31 = dma.done [#allocation4], 32
    $region25: #{smiles_model_forward.1} parent=1 // pred_fallthru
      _
    %32 = sfence
    %33 = vst [vmem:[#allocation2] sm:$0xff] 0.0
    %34 = vst [vmem:[#allocation2 + $0x8] sm:$0xff] 0.0
    %35 = vst [vmem:[#allocation2 + $0x10] sm:$0xff] 0.0
    %36 = vst [vmem:[#allocation2 + $0x18] sm:$0xff] 0.0
    %37 = vst [vmem:[#allocation2 + $0x20] sm:$0xff] 0.0
    %38 = vst [vmem:[#allocation2 + $0x28] sm:$0xff] 0.0
    %39 = vst [vmem:[#allocation2 + $0x30] sm:$0xff] 0.0
    %40 = vst [vmem:[#allocation2 + $0x38] sm:$0xff] 0.0
    %s41 = sld [smem:[#allocation3]]
    %s42 = scalar_lea.vmem %s1, %s41
    %v43 = vld [vmem:[%s42] sm:$0x1]
    %44 = vst [vmem:[#allocation2] sm:$0x1] %v43
    %s45 = sld [smem:[#allocation3 + $0x80]]
    %s46 = scalar_lea.vmem %s1, %s45
    %v47 = vld [vmem:[%s46] sm:$0x1]
    %48 = vst [vmem:[#allocation2 + $0x1] sm:$0x1] %v47
    %s49 = sld [smem:[#allocation3 + $0x1]]
    %s50 = scalar_lea.vmem %s1, %s49
    %v51 = vld [vmem:[%s50] sm:$0x1]
    %52 = vst [vmem:[#allocation2 + $0x8] sm:$0x1] %v51
    %s53 = sld [smem:[#allocation3 + $0x81]]
    %s54 = scalar_lea.vmem %s1, %s53
    %v55 = vld [vmem:[%s54] sm:$0x1]
    %56 = vst [vmem:[#allocation2 + $0x9] sm:$0x1] %v55
    %s57 = sld [smem:[#allocation3 + $0x2]]
    %s58 = scalar_lea.vmem %s1, %s57
    %v59 = vld [vmem:[%s58] sm:$0x1]
    %60 = vst [vmem:[#allocation2 + $0x10] sm:$0x1] %v59
    %s61 = sld [smem:[#allocation3 + $0x82]]
    %s62 = scalar_lea.vmem %s1, %s61
    %v63 = vld [vmem:[%s62] sm:$0x1]
    %64 = vst [vmem:[#allocation2 + $0x11] sm:$0x1] %v63
    %s65 = sld [smem:[#allocation3 + $0x3]]
    %s66 = scalar_lea.vmem %s1, %s65
    %v67 = vld [vmem:[%s66] sm:$0x1]
    %68 = vst [vmem:[#allocation2 + $0x18] sm:$0x1] %v67
    %s69 = sld [smem:[#allocation3 + $0x83]]
    %s70 = scalar_lea.vmem %s1, %s69
    %v71 = vld [vmem:[%s70] sm:$0x1]
    %72 = vst [vmem:[#allocation2 + $0x19] sm:$0x1] %v71
    %s73 = sld [smem:[#allocation3 + $0x4]]
    %s74 = scalar_lea.vmem %s1, %s73
    %v75 = vld [vmem:[%s74] sm:$0x1]
    %76 = vst [vmem:[#allocation2 + $0x20] sm:$0x1] %v75
    %s77 = sld [smem:[#allocation3 + $0x84]]
    %s78 = scalar_lea.vmem %s1, %s77
    %v79 = vld [vmem:[%s78] sm:$0x1]
    %80 = vst [vmem:[#allocation2 + $0x21] sm:$0x1] %v79
    %s81 = sld [smem:[#allocation3 + $0x5]]
    %s82 = scalar_lea.vmem %s1, %s81
    %v83 = vld [vmem:[%s82] sm:$0x1]
    %84 = vst [vmem:[#allocation2 + $0x28] sm:$0x1] %v83
    %s85 = sld [smem:[#allocation3 + $0x85]]
    %s86 = scalar_lea.vmem %s1, %s85
    %v87 = vld [vmem:[%s86] sm:$0x1]
    %88 = vst [vmem:[#allocation2 + $0x29] sm:$0x1] %v87
    %s89 = sld [smem:[#allocation3 + $0x6]]
    %s90 = scalar_lea.vmem %s1, %s89
    %v91 = vld [vmem:[%s90] sm:$0x1]
    %92 = vst [vmem:[#allocation2 + $0x30] sm:$0x1] %v91
    %s93 = sld [smem:[#allocation3 + $0x86]]
    %s94 = scalar_lea.vmem %s1, %s93
    %v95 = vld [vmem:[%s94] sm:$0x1]
    %96 = vst [vmem:[#allocation2 + $0x31] sm:$0x1] %v95
    %s97 = sld [smem:[#allocation3 + $0x7]]
    %s98 = scalar_lea.vmem %s1, %s97
    %v99 = vld [vmem:[%s98] sm:$0x1]
    %100 = vst [vmem:[#allocation2 + $0x38] sm:$0x1] %v99
    %s101 = sld [smem:[#allocation3 + $0x87]]
    %s102 = scalar_lea.vmem %s1, %s101
    %v103 = vld [vmem:[%s102] sm:$0x1]
    %104 = vst [vmem:[#allocation2 + $0x39] sm:$0x1] %v103
    %v105 = vld [vmem:[%s2] sm:$0xff]
    %v106 = vld [vmem:[%s2 + $0x8] sm:$0xff]
    %v107 = vld [vmem:[%s2 + $0x10] sm:$0xff]
    %v108 = vld [vmem:[%s2 + $0x18] sm:$0xff]
    %v109 = vld [vmem:[%s2 + $0x20] sm:$0xff]
    %v110 = vld [vmem:[%s2 + $0x28] sm:$0xff]
    %v111 = vld [vmem:[%s2 + $0x30] sm:$0xff]
    %v112 = vld [vmem:[%s2 + $0x38] sm:$0xff]
    %v113 = vld [vmem:[%s2 + $0x40] sm:$0xff]
    %v114 = vld [vmem:[%s2 + $0x48] sm:$0xff]
    %v115 = vld [vmem:[%s2 + $0x50] sm:$0xff]
    %v116 = vld [vmem:[%s2 + $0x58] sm:$0xff]
    %v117 = vld [vmem:[%s2 + $0x60] sm:$0xff]
    %v118 = vld [vmem:[%s2 + $0x68] sm:$0xff]
    %v119 = vld [vmem:[%s2 + $0x70] sm:$0xff]
    %v120 = vld [vmem:[%s2 + $0x78] sm:$0xff]
    %v121 = vld [vmem:[#allocation2] sm:$0xff]
    %122 = vmatpush.msra.mxu0 %v120
    %123 = vmatpush.msra.mxu0 %v119
    %124 = vmatpush.msra.mxu0 %v118
    %125 = vmatpush.msra.mxu0 %v117
    %126 = vmatpush.msra.mxu0 %v116
    %127 = vmatpush.msra.mxu0 %v115
    %128 = vmatpush.msra.mxu0 %v114
    %129 = vmatpush.msra.mxu0 %v113
    %130 = vmatpush.msra.mxu0 %v112
    %131 = vmatpush.msra.mxu0 %v111
    %132 = vmatpush.msra.mxu0 %v110
    %133 = vmatpush.msra.mxu0 %v109
    %134 = vmatpush.msra.mxu0 %v108
    %135 = vmatpush.msra.mxu0 %v107
    %136 = vmatpush.msra.mxu0 %v106
    %137 = vmatpush.msra.mxu0 %v105
    %138 = vmatmul.f32.gmra.mxu0 0.0
    %v139 = vpop.f32.mrf.mxu0
    %v140 = vadd.f32 0.0, %v139
    %141 = vdwg.mxu0
    %v142 = vadd.f32 %v121, %v140
    %v143 = vtanh.pop %v142
    %s144 = scalar_lea.vmem [#allocation2], 8
    %v145 = vld [vmem:[%s144] sm:$0xff]
    %146 = vmatpush.msra.mxu0 %v120
    %147 = vmatpush.msra.mxu0 %v119
    %148 = vmatpush.msra.mxu0 %v118
    %149 = vmatpush.msra.mxu0 %v117
    %150 = vmatpush.msra.mxu0 %v116
    %151 = vmatpush.msra.mxu0 %v115
    %152 = vmatpush.msra.mxu0 %v114
    %153 = vmatpush.msra.mxu0 %v113
    %154 = vmatpush.msra.mxu0 %v112
    %155 = vmatpush.msra.mxu0 %v111
    %156 = vmatpush.msra.mxu0 %v110
    %157 = vmatpush.msra.mxu0 %v109
    %158 = vmatpush.msra.mxu0 %v108
    %159 = vmatpush.msra.mxu0 %v107
    %160 = vmatpush.msra.mxu0 %v106
    %161 = vmatpush.msra.mxu0 %v105
    %162 = vmatmul.f32.gmra.mxu0 %v143
    %v163 = vpop.f32.mrf.mxu0
    %v164 = vadd.f32 0.0, %v163
    %165 = vdwg.mxu0
    %v166 = vadd.f32 %v145, %v164
    %v167 = vtanh.pop %v166
    %s168 = scalar_lea.vmem [#allocation2], 16
    %v169 = vld [vmem:[%s168] sm:$0xff]
    %170 = vmatpush.msra.mxu0 %v120
    %171 = vmatpush.msra.mxu0 %v119
    %172 = vmatpush.msra.mxu0 %v118
    %173 = vmatpush.msra.mxu0 %v117
    %174 = vmatpush.msra.mxu0 %v116
    %175 = vmatpush.msra.mxu0 %v115
    %176 = vmatpush.msra.mxu0 %v114
    %177 = vmatpush.msra.mxu0 %v113
    %178 = vmatpush.msra.mxu0 %v112
    %179 = vmatpush.msra.mxu0 %v111
    %180 = vmatpush.msra.mxu0 %v110
    %181 = vmatpush.msra.mxu0 %v109
    %182 = vmatpush.msra.mxu0 %v108
    %183 = vmatpush.msra.mxu0 %v107
    %184 = vmatpush.msra.mxu0 %v106
    %185 = vmatpush.msra.mxu0 %v105
    %186 = vmatmul.f32.gmra.mxu0 %v167
    %v187 = vpop.f32.mrf.mxu0
    %v188 = vadd.f32 0.0, %v187
    %189 = vdwg.mxu0
    %v190 = vadd.f32 %v169, %v188
    %v191 = vtanh.pop %v190
    %s192 = scalar_lea.vmem [#allocation2], 24
    %v193 = vld [vmem:[%s192] sm:$0xff]
    %194 = vmatpush.msra.mxu0 %v120
    %195 = vmatpush.msra.mxu0 %v119
    %196 = vmatpush.msra.mxu0 %v118
    %197 = vmatpush.msra.mxu0 %v117
    %198 = vmatpush.msra.mxu0 %v116
    %199 = vmatpush.msra.mxu0 %v115
    %200 = vmatpush.msra.mxu0 %v114
    %201 = vmatpush.msra.mxu0 %v113
    %202 = vmatpush.msra.mxu0 %v112
    %203 = vmatpush.msra.mxu0 %v111
    %204 = vmatpush.msra.mxu0 %v110
    %205 = vmatpush.msra.mxu0 %v109
    %206 = vmatpush.msra.mxu0 %v108
    %207 = vmatpush.msra.mxu0 %v107
    %208 = vmatpush.msra.mxu0 %v106
    %209 = vmatpush.msra.mxu0 %v105
    %210 = vmatmul.f32.gmra.mxu0 %v191
    %v211 = vpop.f32.mrf.mxu0
    %v212 = vadd.f32 0.0, %v211
    %213 = vdwg.mxu0
    %v214 = vadd.f32 %v193, %v212
    %v215 = vtanh.pop %v214
    %s216 = scalar_lea.vmem [#allocation2], 32
    %v217 = vld [vmem:[%s216] sm:$0xff]
    %218 = vmatpush.msra.mxu0 %v120
    %219 = vmatpush.msra.mxu0 %v119
    %220 = vmatpush.msra.mxu0 %v118
    %221 = vmatpush.msra.mxu0 %v117
    %222 = vmatpush.msra.mxu0 %v116
    %223 = vmatpush.msra.mxu0 %v115
    %224 = vmatpush.msra.mxu0 %v114
    %225 = vmatpush.msra.mxu0 %v113
    %226 = vmatpush.msra.mxu0 %v112
    %227 = vmatpush.msra.mxu0 %v111
    %228 = vmatpush.msra.mxu0 %v110
    %229 = vmatpush.msra.mxu0 %v109
    %230 = vmatpush.msra.mxu0 %v108
    %231 = vmatpush.msra.mxu0 %v107
    %232 = vmatpush.msra.mxu0 %v106
    %233 = vmatpush.msra.mxu0 %v105
    %234 = vmatmul.f32.gmra.mxu0 %v215
    %v235 = vpop.f32.mrf.mxu0
    %v236 = vadd.f32 0.0, %v235
    %237 = vdwg.mxu0
    %v238 = vadd.f32 %v217, %v236
    %v239 = vtanh.pop %v238
    %s240 = scalar_lea.vmem [#allocation2], 40
    %v241 = vld [vmem:[%s240] sm:$0xff]
    %242 = vmatpush.msra.mxu0 %v120
    %243 = vmatpush.msra.mxu0 %v119
    %244 = vmatpush.msra.mxu0 %v118
    %245 = vmatpush.msra.mxu0 %v117
    %246 = vmatpush.msra.mxu0 %v116
    %247 = vmatpush.msra.mxu0 %v115
    %248 = vmatpush.msra.mxu0 %v114
    %249 = vmatpush.msra.mxu0 %v113
    %250 = vmatpush.msra.mxu0 %v112
    %251 = vmatpush.msra.mxu0 %v111
    %252 = vmatpush.msra.mxu0 %v110
    %253 = vmatpush.msra.mxu0 %v109
    %254 = vmatpush.msra.mxu0 %v108
    %255 = vmatpush.msra.mxu0 %v107
    %256 = vmatpush.msra.mxu0 %v106
    %257 = vmatpush.msra.mxu0 %v105
    %258 = vmatmul.f32.gmra.mxu0 %v239
    %v259 = vpop.f32.mrf.mxu0
    %v260 = vadd.f32 0.0, %v259
    %261 = vdwg.mxu0
    %v262 = vadd.f32 %v241, %v260
    %v263 = vtanh.pop %v262
    %s264 = scalar_lea.vmem [#allocation2], 48
    %v265 = vld [vmem:[%s264] sm:$0xff]
    %266 = vmatpush.msra.mxu0 %v120
    %267 = vmatpush.msra.mxu0 %v119
    %268 = vmatpush.msra.mxu0 %v118
    %269 = vmatpush.msra.mxu0 %v117
    %270 = vmatpush.msra.mxu0 %v116
    %271 = vmatpush.msra.mxu0 %v115
    %272 = vmatpush.msra.mxu0 %v114
    %273 = vmatpush.msra.mxu0 %v113
    %274 = vmatpush.msra.mxu0 %v112
    %275 = vmatpush.msra.mxu0 %v111
    %276 = vmatpush.msra.mxu0 %v110
    %277 = vmatpush.msra.mxu0 %v109
    %278 = vmatpush.msra.mxu0 %v108
    %279 = vmatpush.msra.mxu0 %v107
    %280 = vmatpush.msra.mxu0 %v106
    %281 = vmatpush.msra.mxu0 %v105
    %282 = vmatmul.f32.gmra.mxu0 %v263
    %v283 = vpop.f32.mrf.mxu0
    %v284 = vadd.f32 0.0, %v283
    %285 = vdwg.mxu0
    %v286 = vadd.f32 %v265, %v284
    %v287 = vtanh.pop %v286
    %s288 = scalar_lea.vmem [#allocation2], 56
    %v289 = vld [vmem:[%s288] sm:$0xff]
    %290 = vmatpush.msra.mxu0 %v120
    %291 = vmatpush.msra.mxu0 %v119
    %292 = vmatpush.msra.mxu0 %v118
    %293 = vmatpush.msra.mxu0 %v117
    %294 = vmatpush.msra.mxu0 %v116
    %295 = vmatpush.msra.mxu0 %v115
    %296 = vmatpush.msra.mxu0 %v114
    %297 = vmatpush.msra.mxu0 %v113
    %298 = vmatpush.msra.mxu0 %v112
    %299 = vmatpush.msra.mxu0 %v111
    %300 = vmatpush.msra.mxu0 %v110
    %301 = vmatpush.msra.mxu0 %v109
    %302 = vmatpush.msra.mxu0 %v108
    %303 = vmatpush.msra.mxu0 %v107
    %304 = vmatpush.msra.mxu0 %v106
    %305 = vmatpush.msra.mxu0 %v105
    %306 = vmatmul.f32.gmra.mxu0 %v287
    %v307 = vpop.f32.mrf.mxu0
    %v308 = vadd.f32 0.0, %v307
    %309 = vdwg.mxu0
    %v310 = vadd.f32 %v289, %v308
    %v311 = vtanh.pop %v310
    %v312 = vld [vmem:[%s3] sm:$0xff]
    %v313 = vld [vmem:[%s3 + $0x8] sm:$0xff]
    %v314 = vld [vmem:[%s3 + $0x10] sm:$0xff]
    %v315 = vld [vmem:[%s3 + $0x18] sm:$0xff]
    %v316 = vld [vmem:[%s3 + $0x20] sm:$0xff]
    %v317 = vld [vmem:[%s3 + $0x28] sm:$0xff]
    %v318 = vld [vmem:[%s3 + $0x30] sm:$0xff]
    %v319 = vld [vmem:[%s3 + $0x38] sm:$0xff]
    %v320 = vld [vmem:[%s3 + $0x40] sm:$0xff]
    %v321 = vld [vmem:[%s3 + $0x48] sm:$0xff]
    %v322 = vld [vmem:[%s3 + $0x50] sm:$0xff]
    %v323 = vld [vmem:[%s3 + $0x58] sm:$0xff]
    %v324 = vld [vmem:[%s3 + $0x60] sm:$0xff]
    %v325 = vld [vmem:[%s3 + $0x68] sm:$0xff]
    %v326 = vld [vmem:[%s3 + $0x70] sm:$0xff]
    %v327 = vld [vmem:[%s3 + $0x78] sm:$0xff]
    %v328 = vld [vmem:[%s4] sm:$0x1]
    %v330 = vperm.slane %v328, 0
    %332 = vmatpush.msra.mxu0 %v327
    %333 = vmatpush.msra.mxu0 %v326
    %334 = vmatpush.msra.mxu0 %v325
    %335 = vmatpush.msra.mxu0 %v324
    %336 = vmatpush.msra.mxu0 %v323
    %337 = vmatpush.msra.mxu0 %v322
    %338 = vmatpush.msra.mxu0 %v321
    %339 = vmatpush.msra.mxu0 %v320
    %340 = vmatpush.msra.mxu0 %v319
    %341 = vmatpush.msra.mxu0 %v318
    %342 = vmatpush.msra.mxu0 %v317
    %343 = vmatpush.msra.mxu0 %v316
    %344 = vmatpush.msra.mxu0 %v315
    %345 = vmatpush.msra.mxu0 %v314
    %346 = vmatpush.msra.mxu0 %v313
    %347 = vmatpush.msra.mxu0 %v312
    %348 = vmatmul.f32.gmra.mxu0 %v311
    %v349 = vpop.f32.mrf.mxu0
    %v350 = vadd.f32 %v330, %v349
    %351 = vdwg.mxu0
    %352 = vst [vmem:[%s5] sm:$0xff] %v350
    // Predicated region
    $region26: #{smiles_model_forward.1} parent=1 // pred_check
      _
    $region27: #{smiles_model_forward.1} parent=1 // pred_check_branch
      %354 = sbr.rel (0) target = $region29
    $region28: #{smiles_model_forward.1} parent=1 // pred_region
      _
    $region29: #{smiles_model_forward.1} parent=1 // pred_fallthru
      _
    // Predicated region
    $region30: #{smiles_model_forward.1} parent=1 // pred_check
      _
    $region31: #{smiles_model_forward.1} parent=1 // pred_check_branch
      %356 = sbr.rel (0) target = $region33
    $region32: #{smiles_model_forward.1} parent=1 // pred_region
      _
    $region33: #{smiles_model_forward.1} parent=1 // pred_fallthru
      _
    %357 = vsyncpa [#allocation4], 1

</llo_original>
